<compile_context>
chip_gen: v7x
topology: tpu7x:2x2x1
jax: 0.10.0
libtpu: 0.0.40
codegen_flags: <defaults>
</compile_context>

<pallas_src>
import numpy as np
import jax
import jax.numpy as jnp
from jax.experimental import pallas as pl
from jax.experimental.pallas import tpu as pltpu


def _sinusoid_table(n_position: int, d_hid: int) -> jnp.ndarray:
    """Deterministic sinusoid position-encoding table, matches the torch module."""
    pos = np.arange(n_position, dtype=np.float64)[:, None]            # (P, 1)
    hid = np.arange(d_hid, dtype=np.int64)[None, :]                   # (1, H)
    angle = pos / np.power(10000.0, 2.0 * (hid // 2) / float(d_hid))  # (P, H)
    table = np.empty((n_position, d_hid), dtype=np.float64)
    table[:, 0::2] = np.sin(angle[:, 0::2])
    table[:, 1::2] = np.cos(angle[:, 1::2])
    return jnp.asarray(table, dtype=jnp.float32)                      # (P, H)


def _vmem_capacity_bytes() -> int:
    """Physical VMEM per TensorCore; fall back to the smallest generation (v7x, 64 MiB)."""
    try:
        return int(pltpu.get_tpu_info().vmem_capacity_bytes)
    except Exception:
        return 64 << 20


def _pick_batch_tile(B: int, D: int, vmem_cap: int) -> int:
    """Largest sublane-aligned batch tile whose double-buffered footprint fits ~half VMEM."""
    if B <= 8:
        return B
    budget = min(vmem_cap, 128 << 20) // 2          # leave half for compiler scratch / pipelining
    # Per batch row (f32, double-buffered): x in 2*D*4 + out 2*(2*D)*4 = 24*D bytes.
    tb = budget // (24 * D)
    tb = max(8, min(int(tb), 1024))
    tb = (tb // 8) * 8
    # Keep >= 2 grid steps so the parallel axis feeds both TensorCores on v7x
    # (neutral on single-core v5e/v6e: one extra ~0.35 us step).
    half = -(-B // 2)
    half = -(-half // 8) * 8
    return max(8, min(tb, half))


def _concat_pos_kernel(idx_ref, x_ref, pos_ref, o_ref):
    # idx_ref : (1,) int32 SMEM scalar-prefetch (consumed only by the index_maps).
    # x_ref   : (TB, D)    VMEM  — current batch tile of x.
    # pos_ref : (1, 1, D)  VMEM  — the single selected pos-table row (picked by BlockSpec).
    # o_ref   : (TB, 2*D)  VMEM  — lane-dense output slab.
    del idx_ref
    TB, D = x_ref.shape
    o_ref[:, :D] = x_ref[...]                                   # first half: x passthrough
    o_ref[:, D:] = jnp.broadcast_to(pos_ref[0], (TB, D))        # second half: pos row broadcast


def index_positional_encoding(x: jnp.ndarray, index, pos_table: jnp.ndarray) -> jnp.ndarray:
    """x: (B, 1, D) float32; index: int scalar; pos_table: (n_position, d_hid), d_hid >= D."""
    B, T, D = x.shape
    assert T == 1, "torch.cat along dim=2 requires the middle dim to be 1"
    n_position, d_hid = pos_table.shape
    assert D <= d_hid

    x2d = x.reshape(B, D)
    # Pre-slice to the D columns actually used (saves DMA when d_hid > D); reshape so the
    # selected row is a clean (1, 1, D) block (its last two dims equal full array dims).
    pos3d = pos_table[:, :D].reshape(n_position, 1, D)
    # Clamp the row index so a bad index can never read out-of-bounds (torch would error).
    idx = jnp.clip(jnp.asarray(index, dtype=jnp.int32), 0, n_position - 1).reshape(1)

    vmem_cap = _vmem_capacity_bytes()
    TB = _pick_batch_tile(B, D, vmem_cap)
    grid = (pl.cdiv(B, TB),)

    grid_spec = pltpu.PrefetchScalarGridSpec(
        num_scalar_prefetch=1,
        grid=grid,
        in_specs=[
            # x: tiled over batch.
            pl.BlockSpec((TB, D), lambda b, idx_ref: (b, 0)),
            # pos_table: exactly ONE row, selected by the prefetched scalar index.
            # Grid-invariant block -> Pallas skips re-DMAing it after the first step.
            pl.BlockSpec((1, 1, D), lambda b, idx_ref: (idx_ref[0], 0, 0)),
        ],
        # Lane-dense (TB, 2*D) output slab; reshaped to (B, 1, 2*D) in the wrapper (free).
        out_specs=pl.BlockSpec((TB, 2 * D), lambda b, idx_ref: (b, 0)),
    )

    # Raise the scoped VMEM limit past per-generation defaults (16/32/32 MiB) when the
    # tile needs it, but never above ~3/4 of physical VMEM.
    footprint = 24 * TB * D + 8 * D + (1 << 20)
    vmem_limit = max(32 << 20, min(int(footprint * 1.5), vmem_cap * 3 // 4))

    # Pure data movement: read x + one pos row, write the concatenated output.
    bytes_accessed = 4 * (B * D + D + B * 2 * D)

    out2d = pl.pallas_call(
        _concat_pos_kernel,
        out_shape=jax.ShapeDtypeStruct((B, 2 * D), jnp.float32),
        grid_spec=grid_spec,
        compiler_params=pltpu.CompilerParams(
            dimension_semantics=("parallel",),
            vmem_limit_bytes=vmem_limit),
        cost_estimate=pl.CostEstimate(
            flops=0, transcendentals=0, bytes_accessed=bytes_accessed),
    )(idx, x2d, pos3d)

    # (B, 2*D) -> (B, 1, 2*D): identical row-major bytes, i.e. [x_b | pos_row] per batch row.
    return out2d.reshape(B, 1, 2 * D)


if __name__ == "__main__":
    key = jax.random.PRNGKey(0)

    # --- Small, module-consistent demo shapes ---
    B, D = 2, 32          # x: (B, 1, D)
    d_hid = 32            # pos_table hidden size (>= D)
    n_position = 16
    index = 3

    x = jax.random.normal(key, (B, 1, D), dtype=jnp.float32)
    pos_table = _sinusoid_table(n_position, d_hid)

    out = jax.block_until_ready(index_positional_encoding(x, index, pos_table))
    ref = jnp.concatenate(
        [x, jnp.broadcast_to(pos_table[index:index + 1, :D][None], (B, 1, D))], axis=2)
    assert out.shape == (B, 1, 2 * D)
    np.testing.assert_allclose(np.asarray(out), np.asarray(ref), rtol=1e-6, atol=1e-6)

    # --- Larger batch: exercises TB > 8, the lane-dense slab, d_hid > D pre-slice,
    #     and a padded (partial) last grid block ---
    B2, D2, d_hid2, n_pos2, index2 = 40, 128, 160, 64, 7
    key2, _ = jax.random.split(key)
    x2 = jax.random.normal(key2, (B2, 1, D2), dtype=jnp.float32)
    pos_table2 = _sinusoid_table(n_pos2, d_hid2)

    out2 = jax.block_until_ready(index_positional_encoding(x2, index2, pos_table2))
    ref2 = jnp.concatenate(
        [x2, jnp.broadcast_to(pos_table2[index2:index2 + 1, :D2][None], (B2, 1, D2))], axis=2)
    assert out2.shape == (B2, 1, 2 * D2)
    np.testing.assert_allclose(np.asarray(out2), np.asarray(ref2), rtol=1e-6, atol=1e-6)

    print("KERNEL_OK")
</pallas_src>

<mosaic_0001>
module attributes {stable_mosaic.version = 11 : i64} {
  func.func @_concat_pos_kernel(%arg0: i32, %arg1: memref<1xi32, #tpu.memory_space<smem>>, %arg2: memref<2x32xf32, #tpu.memory_space<vmem>>, %arg3: memref<1x1x32xf32, #tpu.memory_space<vmem>>, %arg4: memref<2x64xf32, #tpu.memory_space<vmem>>) attributes {dimension_semantics = [#tpu.dimension_semantics<parallel>], iteration_bounds = array<i64: 1>, scalar_prefetch = 1 : i64, scratch_operands = 0 : i64, tpu.core_type = #tpu.core_type<tc>, window_params = [{transform_indices = @transform_0, window_bounds = array<i64: 2, 32>}, {transform_indices = @transform_1, window_bounds = array<i64: 1, 1, 32>}, {transform_indices = @transform_2, window_bounds = array<i64: 2, 64>}]} {
    %c0 = arith.constant 0 : index
    %c0_0 = arith.constant 0 : index
    %0 = vector.load %arg2[%c0, %c0_0] : memref<2x32xf32, #tpu.memory_space<vmem>>, vector<2x32xf32>
    %c0_1 = arith.constant 0 : index
    %c0_2 = arith.constant 0 : index
    %1 = vector.load %arg4[%c0_1, %c0_2] : memref<2x64xf32, #tpu.memory_space<vmem>>, vector<2x32xf32>
    tpu.vector_store %arg4[%c0_1, %c0_2], %0 {strides = array<i32>} : memref<2x64xf32, #tpu.memory_space<vmem>>, vector<2x32xf32>,
    %c0_3 = arith.constant 0 : index
    %c0_4 = arith.constant 0 : index
    %c0_5 = arith.constant 0 : index
    %2 = vector.load %arg3[%c0_3, %c0_4, %c0_5] : memref<1x1x32xf32, #tpu.memory_space<vmem>>, vector<1x1x32xf32>
    %3 = vector.shape_cast %2 : vector<1x1x32xf32> to vector<1x32xf32>
    %4 = vector.shape_cast %3 : vector<1x32xf32> to vector<1x32xf32>
    %5 = vector.broadcast %4 : vector<1x32xf32> to vector<2x32xf32>
    %c0_6 = arith.constant 0 : index
    %c32 = arith.constant 32 : index
    %6 = vector.load %arg4[%c0_6, %c32] : memref<2x64xf32, #tpu.memory_space<vmem>>, vector<2x32xf32>
    tpu.vector_store %arg4[%c0_6, %c32], %5 {strides = array<i32>} : memref<2x64xf32, #tpu.memory_space<vmem>>, vector<2x32xf32>,
    return
  }
  func.func @transform_0(%arg0: i32, %arg1: memref<1xi32, #tpu.memory_space<smem>>) -> (i32, i32) {
    %c0_i32 = arith.constant 0 : i32
    %c0_i32_0 = arith.constant 0 : i32
    return %arg0, %c0_i32 : i32, i32
  }
  func.func @transform_1(%arg0: i32, %arg1: memref<1xi32, #tpu.memory_space<smem>>) -> (i32, i32, i32) {
    %c0 = arith.constant 0 : index
    %0 = memref.load %arg1[%c0] : memref<1xi32, #tpu.memory_space<smem>>
    %c0_i32 = arith.constant 0 : i32
    %c0_i32_0 = arith.constant 0 : i32
    %c0_i32_1 = arith.constant 0 : i32
    return %0, %c0_i32, %c0_i32_0 : i32, i32, i32
  }
  func.func @transform_2(%arg0: i32, %arg1: memref<1xi32, #tpu.memory_space<smem>>) -> (i32, i32) {
    %c0_i32 = arith.constant 0 : i32
    %c0_i32_0 = arith.constant 0 : i32
    return %arg0, %c0_i32 : i32, i32
  }
}

</mosaic_0001>

<llo_original>
// kernel: tpu_custom_call.1
$region0: #{tpu_custom_call.1}
  #allocation0 [shape = 'u32[]', space=smem, size = 0x4, offset = 0x4, fixed_abs, tag = 'smem constant byte address 0x4 - core index']
  #allocation1 [shape = 'u32[144,128]{1,0:T(1,128)}', space=vmem, size = 0x12000, scoped, tag = 'internal scratch']
  #allocation2 [shape = 's32[1]{0}', space=sflag, size = 0x4, scoped, tag = 'scoped memory for tpu_custom_call.1']
  #allocation3 [shape = 's32[1]{0:T(128)S(6)}', space=smem, size = 0x200, scoped, tag = 'prefetched SMEM operand 0']
  %s0 = inlined_call_operand.<no memory space> [shape: s32[1], index: 0, kind: input, shape index: {}]
  %s1 = inlined_call_operand.vmem [shape: f32[2,32], index: 1, kind: input, shape index: {}]
  %s2 = inlined_call_operand.hbm [shape: f32[16,1,32], index: 2, kind: input, shape index: {}]
  %s3 = inlined_call_operand.hbm [shape: f32[2,64], index: 3, kind: output, shape index: {}]
  %s4 = sld [smem:[#allocation0]]
  $region22: #{tpu_custom_call.1} parent=0
    _
  %s6 = ssub.s32 1, %s4
  %s7 = scalar_select 0, %s6, %s4
  %8 = sst [smem:[#allocation3]] %s0
  $region1: #{tpu_custom_call.1} parent=0
    #allocation4 [shape = 'u8[512]{0}', space=vmem, size = 0x400, scoped, tag = 'input window, operand 2, single buffered']
    #allocation5 [shape = 's32[1]{0}', space=sflag, size = 0x4, scoped, tag = 'scoped memory for tpu_custom_call.1']
    #allocation6 [shape = 's32[1]{0}', space=sflag, size = 0x4, scoped, tag = 'scoped memory for tpu_custom_call.1']
    #allocation7 [shape = 'u8[1024]{0}', space=vmem, size = 0x400, scoped, tag = 'output window, operand 0, single buffered']
    %9 = vsyncpa [#allocation5], 0
    %10 = vsyncpa [#allocation6], 0
    // Predicated region
    $region2: #{tpu_custom_call.1} parent=1 // pred_check
      _
    $region3: #{tpu_custom_call.1} parent=1 // pred_check_branch
      %12 = sbr.rel (0) target = $region5
    $region4: #{tpu_custom_call.1} parent=1 // pred_region
      _
    $region5: #{tpu_custom_call.1} parent=1 // pred_fallthru
      _
    // Predicated region
    $region6: #{tpu_custom_call.1} parent=1 // pred_check
      _
    $region7: #{tpu_custom_call.1} parent=1 // pred_check_branch
      %14 = sbr.rel (0) target = $region9
    $region8: #{tpu_custom_call.1} parent=1 // pred_region
      %s15 = sld [smem:[#allocation3]]
      %s17 = ssub.s32 16, 16
      %18 = vsyncadd [#allocation5], %s17
      %s19 = smul.addr %s15, 16
      %s20 = scalar_lea.hbm %s2, %s19
      %s22 = sshll.u32 [#allocation4], 4
      %s23 = int_to_ptr.vmem [resolvable:$true] %s22
      %25 = dma.hbm_to_vmem [thread:$0]  %s20, 16, %s23, [#allocation5]
    $region9: #{tpu_custom_call.1} parent=1 // pred_fallthru
      _
    // Predicated region
    $region10: #{tpu_custom_call.1} parent=1 // pred_check
      _
    $region11: #{tpu_custom_call.1} parent=1 // pred_check_branch
      %27 = sbr.rel (0) target = $region13
    $region12: #{tpu_custom_call.1} parent=1 // pred_region
      %28 = dma.done [#allocation5], 16
    $region13: #{tpu_custom_call.1} parent=1 // pred_fallthru
      _
    %s29 = sld [smem:[#allocation3]]
    %v30 = vld [vmem:[%s1] sm:$0x3]
    %vm31 = vcmask 254976
    %32 = vst.msk [vmem:[#allocation7] sm:$0x3] %vm31, %v30
    %v33 = vld [vmem:[#allocation4] sm:$0x1]
    %v35 = vlaneseq
    %v36 = vshrl.u32 %v35, 7
    %v37 = vsub.s32 0, %v36
    %v38 = vrot.slane %v33, %v37
    %39 = vrot.lane.b32.xlu0 %v38, 32
    %v40 = vpop.permute.xlu0 %39
    %vm42 = vcmask 517376
    %43 = vst.msk [vmem:[#allocation7] sm:$0x3] %vm42, %v40
    // Predicated region
    $region14: #{tpu_custom_call.1} parent=1 // pred_check
      _
    $region15: #{tpu_custom_call.1} parent=1 // pred_check_branch
      %45 = sbr.rel (0) target = $region17
    $region16: #{tpu_custom_call.1} parent=1 // pred_region
      %s47 = ssub.s32 32, 32
      %48 = vsyncadd [#allocation6], %s47
      %s50 = sshll.u32 [#allocation7], 4
      %s51 = int_to_ptr.vmem [resolvable:$true] %s50
      %53 = dma.vmem_to_hbm [thread:$0]  %s51, 32, %s3, [#allocation6]
    $region17: #{tpu_custom_call.1} parent=1 // pred_fallthru
      _
    // Predicated region
    $region18: #{tpu_custom_call.1} parent=1 // pred_check
      _
    $region19: #{tpu_custom_call.1} parent=1 // pred_check_branch
      %55 = sbr.rel (0) target = $region21
    $region20: #{tpu_custom_call.1} parent=1 // pred_region
      %56 = dma.done [#allocation6], 32
    $region21: #{tpu_custom_call.1} parent=1 // pred_fallthru
      _
    %57 = vsyncpa [#allocation5], 1
    %58 = vsyncpa [#allocation6], 1

</llo_original>
